<compile_context>
chip_gen: v5e
topology: v5e:2x2
jax: 0.10.0
libtpu: 0.0.40
codegen_flags: <defaults>
</compile_context>

<pallas_src>
import functools
import math

import jax
import jax.numpy as jnp
from jax import lax
from jax.experimental import pallas as pl
from jax.experimental.pallas import tpu as pltpu


# ---------------------------------------------------------------------------
# Kernel A: fused QKV projection
# ---------------------------------------------------------------------------
def _qkv_proj_kernel(x_ref, wq_ref, wk_ref, wv_ref, bq_ref, bk_ref, bv_ref,
                     q_ref, k_ref, v_ref, *, compute_dtype):
    x = x_ref[...].astype(compute_dtype)                       # (tr, C)
    for w_ref, b_ref, o_ref in ((wq_ref, bq_ref, q_ref),
                                (wk_ref, bk_ref, k_ref),
                                (wv_ref, bv_ref, v_ref)):
        y = jnp.dot(x, w_ref[...], preferred_element_type=jnp.float32)
        y = y + b_ref[...].astype(jnp.float32)                 # (tr, C)
        o_ref[...] = y.astype(o_ref.dtype)


# ---------------------------------------------------------------------------
# Kernel B: causal flash attention + fused output projection
# ---------------------------------------------------------------------------
def _flash_attn_kernel(q_ref, k_ref, v_ref, wproj_ref, bproj_ref, o_ref,
                       m_ref, l_ref, acc_ref, *, n_head, scale,
                       compute_dtype, approx_recip):
    qi = pl.program_id(1)
    ki = pl.program_id(2)
    tq, C = q_ref.shape
    tk = k_ref.shape[0]
    D = C // n_head

    @pl.when(ki == 0)
    def _init():
        m_ref[...] = jnp.full_like(m_ref, -jnp.inf)
        l_ref[...] = jnp.zeros_like(l_ref)
        acc_ref[...] = jnp.zeros_like(acc_ref)

    def flash_update(apply_mask):
        q = q_ref[...]                                         # (tq, C)
        k = k_ref[...]                                         # (tk, C)
        v = v_ref[...]                                         # (tk, C)
        if apply_mask:
            # Diagonal tile only (tq == tk, same global offset): local mask.
            row = lax.broadcasted_iota(jnp.int32, (tq, tk), 0)
            col = lax.broadcasted_iota(jnp.int32, (tq, tk), 1)
            keep = col <= row
            neg = jnp.float32(-1e30)   # finite: avoids exp(-inf - -inf) NaNs
        # Static (unrolled) head loop; all slices are static column views.
        for h in range(n_head):
            sl = slice(h * D, (h + 1) * D)
            q_h = q[:, sl]                                     # (tq, D)
            k_h = k[:, sl]                                     # (tk, D)
            v_h = v[:, sl]                                     # (tk, D)
            s = lax.dot_general(q_h, k_h, (((1,), (1,)), ((), ())),
                                preferred_element_type=jnp.float32) * scale
            if apply_mask:
                s = jnp.where(keep, s, neg)                    # (tq, tk) f32
            m_prev = m_ref[:, sl]                              # (tq, D)
            m_cur = jnp.max(s, axis=-1, keepdims=True)         # (tq, 1)
            m_new = jnp.maximum(m_prev, m_cur)                 # (tq, D)
            alpha = jnp.exp(m_prev - m_new)                    # (tq, D)
            p = jnp.exp(s - m_new[:, :1])                      # (tq, tk) f32
            l_ref[:, sl] = alpha * l_ref[:, sl] + jnp.sum(p, axis=-1,
                                                          keepdims=True)
            acc_ref[:, sl] = alpha * acc_ref[:, sl] + jnp.dot(
                p.astype(compute_dtype), v_h,
                preferred_element_type=jnp.float32)
            m_ref[:, sl] = m_new

    @pl.when(ki < qi)           # strictly-below-diagonal tile: no mask needed
    def _off_diag():
        flash_update(apply_mask=False)

    @pl.when(ki == qi)          # diagonal tile: apply causal mask
    def _diag():
        flash_update(apply_mask=True)
    # ki > qi: fully masked tile -> skipped entirely (no MXU/EUP work).

    @pl.when(ki == pl.num_programs(2) - 1)
    def _finalize():
        inv_l = pl.reciprocal(l_ref[...], approx=approx_recip)  # (tq, C)
        y = (acc_ref[...] * inv_l).astype(compute_dtype)        # (tq, C)
        out = jnp.dot(y, wproj_ref[...],
                      preferred_element_type=jnp.float32)
        out = out + bproj_ref[...].astype(jnp.float32)
        o_ref[...] = out.astype(o_ref.dtype)


# ---------------------------------------------------------------------------
# Wrapper
# ---------------------------------------------------------------------------
def _pick_seq_tile(T, target=256):
    """Largest tile <= target that divides T (prefer multiples of 8)."""
    if T <= target:
        return T
    for t in range(target, 7, -1):
        if T % t == 0 and t % 8 == 0:
            return t
    return T


def causal_self_attention(x, w_attn, b_attn, w_proj, b_proj, n_head,
                          *, compute_dtype=jnp.bfloat16, seq_block=256):
    """x: (B, T, C); w_attn: (C, 3C); w_proj: (C, C).  Returns (B, T, C)."""
    B, T, C = x.shape
    assert C % n_head == 0
    D = C // n_head
    scale = 1.0 / math.sqrt(D)

    t_blk = _pick_seq_tile(T, seq_block)
    n_t = T // t_blk

    cdt = jnp.dtype(compute_dtype)
    approx_recip = (cdt == jnp.dtype(jnp.bfloat16))
    vmem_limit = 48 * 1024 * 1024

    # One-time host-side weight prep: per-output-split weights in compute dtype,
    # biases as (1, C) f32.
    wq, wk, wv = jnp.split(w_attn.astype(cdt), 3, axis=1)          # (C, C) each
    bq, bk, bv = jnp.split(b_attn.reshape(1, 3 * C), 3, axis=1)    # (1, C) each
    wp = w_proj.astype(cdt)                                        # (C, C)
    bp = b_proj.reshape(1, C)                                      # (1, C)

    # Weights/biases: whole-array VMEM residents (no pipeline double-buffering).
    weight_spec = pl.BlockSpec(memory_space=pltpu.MemorySpace.VMEM)

    # --- Kernel A: QKV projection -------------------------------------------
    qkv_kernel = functools.partial(_qkv_proj_kernel, compute_dtype=cdt)
    row_spec = pl.BlockSpec((pl.Squeezed(), t_blk, C), lambda b, r: (b, r, 0))
    q, k, v = pl.pallas_call(
        qkv_kernel,
        out_shape=tuple(jax.ShapeDtypeStruct((B, T, C), cdt) for _ in range(3)),
        grid_spec=pltpu.PrefetchScalarGridSpec(
            num_scalar_prefetch=0,
            grid=(B, n_t),
            in_specs=[row_spec,
                      weight_spec, weight_spec, weight_spec,
                      weight_spec, weight_spec, weight_spec],
            out_specs=(row_spec, row_spec, row_spec),
        ),
        compiler_params=pltpu.CompilerParams(
            dimension_semantics=("parallel", "parallel"),
            vmem_limit_bytes=vmem_limit),
    )(x, wq, wk, wv, bq, bk, bv)

    # --- Kernel B: flash attention + output projection -----------------------
    flash_kernel = functools.partial(
        _flash_attn_kernel, n_head=n_head, scale=scale,
        compute_dtype=cdt, approx_recip=approx_recip)

    q_map = lambda b, qi, ki: (b, qi, 0)
    # Clamp so skipped (fully-masked) k-tiles re-use the previous block: no DMA.
    kv_map = lambda b, qi, ki: (b, jnp.minimum(ki, qi), 0)

    out = pl.pallas_call(
        flash_kernel,
        out_shape=jax.ShapeDtypeStruct((B, T, C), x.dtype),
        grid_spec=pltpu.PrefetchScalarGridSpec(
            num_scalar_prefetch=0,
            grid=(B, n_t, n_t),
            in_specs=[
                pl.BlockSpec((pl.Squeezed(), t_blk, C), q_map),     # q
                pl.BlockSpec((pl.Squeezed(), t_blk, C), kv_map),    # k
                pl.BlockSpec((pl.Squeezed(), t_blk, C), kv_map),    # v
                weight_spec,                                        # w_proj
                weight_spec,                                        # b_proj
            ],
            out_specs=pl.BlockSpec((pl.Squeezed(), t_blk, C), q_map),
            scratch_shapes=[
                pltpu.VMEM((t_blk, C), jnp.float32),   # running max (per head)
                pltpu.VMEM((t_blk, C), jnp.float32),   # running sum (per head)
                pltpu.VMEM((t_blk, C), jnp.float32),   # f32 accumulator
            ],
        ),
        compiler_params=pltpu.CompilerParams(
            dimension_semantics=("parallel", "parallel", "arbitrary"),
            vmem_limit_bytes=vmem_limit),
    )(q, k, v, wp, bp)
    return out


# ---------------------------------------------------------------------------
# Pure-JAX reference (matches the PyTorch module's forward, inference path)
# ---------------------------------------------------------------------------
def reference(x, w_attn, b_attn, w_proj, b_proj, n_head):
    B, T, C = x.shape
    D = C // n_head
    qkv = x @ w_attn + b_attn
    q, k, v = jnp.split(qkv, 3, axis=-1)
    q = q.reshape(B, T, n_head, D).transpose(0, 2, 1, 3)
    k = k.reshape(B, T, n_head, D).transpose(0, 2, 1, 3)
    v = v.reshape(B, T, n_head, D).transpose(0, 2, 1, 3)
    att = jnp.einsum('bhtd,bhsd->bhts', q, k) / math.sqrt(D)
    mask = jnp.tril(jnp.ones((T, T), bool))
    att = jnp.where(mask[None, None], att, -jnp.inf)
    att = jax.nn.softmax(att, axis=-1)
    y = jnp.einsum('bhts,bhsd->bhtd', att, v)
    y = y.transpose(0, 2, 1, 3).reshape(B, T, C)
    return y @ w_proj + b_proj


if __name__ == "__main__":
    # Small config consistent with the module: n_embd divisible by n_head.
    B, T, C, H = 2, 16, 32, 4

    key = jax.random.PRNGKey(0)
    kx, k1, k2, k3, k4 = jax.random.split(key, 5)

    x = jax.random.normal(kx, (B, T, C), dtype=jnp.float32)

    bound = 1.0 / math.sqrt(C)
    w_attn = jax.random.uniform(k1, (C, 3 * C), minval=-bound, maxval=bound,
                                dtype=jnp.float32)
    b_attn = jax.random.uniform(k2, (3 * C,), minval=-bound, maxval=bound,
                                dtype=jnp.float32)
    w_proj = jax.random.uniform(k3, (C, C), minval=-bound, maxval=bound,
                                dtype=jnp.float32)
    b_proj = jax.random.uniform(k4, (C,), minval=-bound, maxval=bound,
                                dtype=jnp.float32)

    ref = reference(x, w_attn, b_attn, w_proj, b_proj, H)

    # f32 compute, multi-tile (exercises online softmax, causal tile skipping,
    # clamped k/v index maps) — tight tolerance.
    out_f32 = causal_self_attention(x, w_attn, b_attn, w_proj, b_proj, H,
                                    compute_dtype=jnp.float32, seq_block=8)
    out_f32 = jax.block_until_ready(out_f32)
    assert out_f32.shape == (B, T, C)
    assert jnp.allclose(out_f32, ref, atol=1e-4, rtol=1e-4), \
        "f32 kernel mismatch vs reference"

    # Default bf16 MXU path — relaxed tolerance for bf16 rounding.
    out_bf16 = causal_self_attention(x, w_attn, b_attn, w_proj, b_proj, H)
    out_bf16 = jax.block_until_ready(out_bf16)
    assert jnp.allclose(out_bf16, ref, atol=5e-2, rtol=5e-2), \
        "bf16 kernel mismatch vs reference"

    print("KERNEL_OK")
</pallas_src>

<mosaic_0001>
module attributes {stable_mosaic.version = 11 : i64} {
  func.func @_qkv_proj_kernel(%arg0: i32, %arg1: i32, %arg2: memref<1x8x32xf32, #tpu.memory_space<vmem>>, %arg3: memref<32x32xf32, #tpu.memory_space<vmem>>, %arg4: memref<32x32xf32, #tpu.memory_space<vmem>>, %arg5: memref<32x32xf32, #tpu.memory_space<vmem>>, %arg6: memref<1x32xf32, #tpu.memory_space<vmem>>, %arg7: memref<1x32xf32, #tpu.memory_space<vmem>>, %arg8: memref<1x32xf32, #tpu.memory_space<vmem>>, %arg9: memref<1x8x32xf32, #tpu.memory_space<vmem>>, %arg10: memref<1x8x32xf32, #tpu.memory_space<vmem>>, %arg11: memref<1x8x32xf32, #tpu.memory_space<vmem>>) attributes {dimension_semantics = [#tpu.dimension_semantics<parallel>, #tpu.dimension_semantics<parallel>], iteration_bounds = array<i64: 2, 2>, scalar_prefetch = 0 : i64, scratch_operands = 0 : i64, tpu.core_type = #tpu.core_type<tc>, window_params = [{transform_indices = @transform_0, window_bounds = array<i64: 1, 8, 32>}, {pipeline_mode = #tpu.pipeline_mode<synchronous>, transform_indices = @transform_1, window_bounds = array<i64: 32, 32>}, {pipeline_mode = #tpu.pipeline_mode<synchronous>, transform_indices = @transform_2, window_bounds = array<i64: 32, 32>}, {pipeline_mode = #tpu.pipeline_mode<synchronous>, transform_indices = @transform_3, window_bounds = array<i64: 32, 32>}, {pipeline_mode = #tpu.pipeline_mode<synchronous>, transform_indices = @transform_4, window_bounds = array<i64: 1, 32>}, {pipeline_mode = #tpu.pipeline_mode<synchronous>, transform_indices = @transform_5, window_bounds = array<i64: 1, 32>}, {pipeline_mode = #tpu.pipeline_mode<synchronous>, transform_indices = @transform_6, window_bounds = array<i64: 1, 32>}, {transform_indices = @transform_7, window_bounds = array<i64: 1, 8, 32>}, {transform_indices = @transform_8, window_bounds = array<i64: 1, 8, 32>}, {transform_indices = @transform_9, window_bounds = array<i64: 1, 8, 32>}]} {
    %c0 = arith.constant 0 : index
    %c0_0 = arith.constant 0 : index
    %c0_1 = arith.constant 0 : index
    %0 = vector.load %arg2[%c0, %c0_0, %c0_1] : memref<1x8x32xf32, #tpu.memory_space<vmem>>, vector<1x8x32xf32>
    %1 = vector.shape_cast %0 : vector<1x8x32xf32> to vector<8x32xf32>
    %c0_2 = arith.constant 0 : index
    %c0_3 = arith.constant 0 : index
    %2 = vector.load %arg3[%c0_2, %c0_3] : memref<32x32xf32, #tpu.memory_space<vmem>>, vector<32x32xf32>
    %cst = arith.constant dense<0.000000e+00> : vector<8x32xf32>
    %3 = tpu.matmul %1, %2, %cst {dimension_numbers = #tpu.dot_dimension_numbers<[1], [0], [0], [1], [0, 0, 1, 1], [], []>} : vector<8x32xf32>, vector<32x32xf32>, vector<8x32xf32> -> vector<8x32xf32>
    %c0_4 = arith.constant 0 : index
    %c0_5 = arith.constant 0 : index
    %4 = vector.load %arg6[%c0_4, %c0_5] : memref<1x32xf32, #tpu.memory_space<vmem>>, vector<1x32xf32>
    %5 = vector.broadcast %4 : vector<1x32xf32> to vector<8x32xf32>
    %6 = arith.addf %3, %5 : vector<8x32xf32>
    %c0_6 = arith.constant 0 : index
    %c0_7 = arith.constant 0 : index
    %c0_8 = arith.constant 0 : index
    %7 = vector.load %arg9[%c0_6, %c0_7, %c0_8] : memref<1x8x32xf32, #tpu.memory_space<vmem>>, vector<1x8x32xf32>
    %8 = vector.shape_cast %7 : vector<1x8x32xf32> to vector<8x32xf32>
    %9 = vector.shape_cast %6 : vector<8x32xf32> to vector<1x8x32xf32>
    tpu.vector_store %arg9[%c0_6, %c0_7, %c0_8], %9 {strides = array<i32>} : memref<1x8x32xf32, #tpu.memory_space<vmem>>, vector<1x8x32xf32>,
    %c0_9 = arith.constant 0 : index
    %c0_10 = arith.constant 0 : index
    %10 = vector.load %arg4[%c0_9, %c0_10] : memref<32x32xf32, #tpu.memory_space<vmem>>, vector<32x32xf32>
    %cst_11 = arith.constant dense<0.000000e+00> : vector<8x32xf32>
    %11 = tpu.matmul %1, %10, %cst_11 {dimension_numbers = #tpu.dot_dimension_numbers<[1], [0], [0], [1], [0, 0, 1, 1], [], []>} : vector<8x32xf32>, vector<32x32xf32>, vector<8x32xf32> -> vector<8x32xf32>
    %c0_12 = arith.constant 0 : index
    %c0_13 = arith.constant 0 : index
    %12 = vector.load %arg7[%c0_12, %c0_13] : memref<1x32xf32, #tpu.memory_space<vmem>>, vector<1x32xf32>
    %13 = vector.broadcast %12 : vector<1x32xf32> to vector<8x32xf32>
    %14 = arith.addf %11, %13 : vector<8x32xf32>
    %c0_14 = arith.constant 0 : index
    %c0_15 = arith.constant 0 : index
    %c0_16 = arith.constant 0 : index
    %15 = vector.load %arg10[%c0_14, %c0_15, %c0_16] : memref<1x8x32xf32, #tpu.memory_space<vmem>>, vector<1x8x32xf32>
    %16 = vector.shape_cast %15 : vector<1x8x32xf32> to vector<8x32xf32>
    %17 = vector.shape_cast %14 : vector<8x32xf32> to vector<1x8x32xf32>
    tpu.vector_store %arg10[%c0_14, %c0_15, %c0_16], %17 {strides = array<i32>} : memref<1x8x32xf32, #tpu.memory_space<vmem>>, vector<1x8x32xf32>,
    %c0_17 = arith.constant 0 : index
    %c0_18 = arith.constant 0 : index
    %18 = vector.load %arg5[%c0_17, %c0_18] : memref<32x32xf32, #tpu.memory_space<vmem>>, vector<32x32xf32>
    %cst_19 = arith.constant dense<0.000000e+00> : vector<8x32xf32>
    %19 = tpu.matmul %1, %18, %cst_19 {dimension_numbers = #tpu.dot_dimension_numbers<[1], [0], [0], [1], [0, 0, 1, 1], [], []>} : vector<8x32xf32>, vector<32x32xf32>, vector<8x32xf32> -> vector<8x32xf32>
    %c0_20 = arith.constant 0 : index
    %c0_21 = arith.constant 0 : index
    %20 = vector.load %arg8[%c0_20, %c0_21] : memref<1x32xf32, #tpu.memory_space<vmem>>, vector<1x32xf32>
    %21 = vector.broadcast %20 : vector<1x32xf32> to vector<8x32xf32>
    %22 = arith.addf %19, %21 : vector<8x32xf32>
    %c0_22 = arith.constant 0 : index
    %c0_23 = arith.constant 0 : index
    %c0_24 = arith.constant 0 : index
    %23 = vector.load %arg11[%c0_22, %c0_23, %c0_24] : memref<1x8x32xf32, #tpu.memory_space<vmem>>, vector<1x8x32xf32>
    %24 = vector.shape_cast %23 : vector<1x8x32xf32> to vector<8x32xf32>
    %25 = vector.shape_cast %22 : vector<8x32xf32> to vector<1x8x32xf32>
    tpu.vector_store %arg11[%c0_22, %c0_23, %c0_24], %25 {strides = array<i32>} : memref<1x8x32xf32, #tpu.memory_space<vmem>>, vector<1x8x32xf32>,
    return
  }
  func.func @transform_0(%arg0: i32, %arg1: i32) -> (i32, i32, i32) {
    %c0_i32 = arith.constant 0 : i32
    %c0_i32_0 = arith.constant 0 : i32
    return %arg0, %arg1, %c0_i32 : i32, i32, i32
  }
  func.func @transform_1(%arg0: i32, %arg1: i32) -> (i32, i32) {
    %c0_i32 = arith.constant 0 : i32
    %c0_i32_0 = arith.constant 0 : i32
    %c0_i32_1 = arith.constant 0 : i32
    return %c0_i32, %c0_i32_0 : i32, i32
  }
  func.func @transform_2(%arg0: i32, %arg1: i32) -> (i32, i32) {
    %c0_i32 = arith.constant 0 : i32
    %c0_i32_0 = arith.constant 0 : i32
    %c0_i32_1 = arith.constant 0 : i32
    return %c0_i32, %c0_i32_0 : i32, i32
  }
  func.func @transform_3(%arg0: i32, %arg1: i32) -> (i32, i32) {
    %c0_i32 = arith.constant 0 : i32
    %c0_i32_0 = arith.constant 0 : i32
    %c0_i32_1 = arith.constant 0 : i32
    return %c0_i32, %c0_i32_0 : i32, i32
  }
  func.func @transform_4(%arg0: i32, %arg1: i32) -> (i32, i32) {
    %c0_i32 = arith.constant 0 : i32
    %c0_i32_0 = arith.constant 0 : i32
    %c0_i32_1 = arith.constant 0 : i32
    return %c0_i32, %c0_i32_0 : i32, i32
  }
  func.func @transform_5(%arg0: i32, %arg1: i32) -> (i32, i32) {
    %c0_i32 = arith.constant 0 : i32
    %c0_i32_0 = arith.constant 0 : i32
    %c0_i32_1 = arith.constant 0 : i32
    return %c0_i32, %c0_i32_0 : i32, i32
  }
  func.func @transform_6(%arg0: i32, %arg1: i32) -> (i32, i32) {
    %c0_i32 = arith.constant 0 : i32
    %c0_i32_0 = arith.constant 0 : i32
    %c0_i32_1 = arith.constant 0 : i32
    return %c0_i32, %c0_i32_0 : i32, i32
  }
  func.func @transform_7(%arg0: i32, %arg1: i32) -> (i32, i32, i32) {
    %c0_i32 = arith.constant 0 : i32
    %c0_i32_0 = arith.constant 0 : i32
    return %arg0, %arg1, %c0_i32 : i32, i32, i32
  }
  func.func @transform_8(%arg0: i32, %arg1: i32) -> (i32, i32, i32) {
    %c0_i32 = arith.constant 0 : i32
    %c0_i32_0 = arith.constant 0 : i32
    return %arg0, %arg1, %c0_i32 : i32, i32, i32
  }
  func.func @transform_9(%arg0: i32, %arg1: i32) -> (i32, i32, i32) {
    %c0_i32 = arith.constant 0 : i32
    %c0_i32_0 = arith.constant 0 : i32
    return %arg0, %arg1, %c0_i32 : i32, i32, i32
  }
}

</mosaic_0001>

<llo_original>
// kernel: tpu_custom_call.1
$region0: #{tpu_custom_call.1}
  #allocation0 [shape = 'u32[]', space=smem, size = 0x4, offset = 0x4, fixed_abs, tag = 'smem constant byte address 0x4 - core index']
  #allocation1 [shape = 'u32[72,128]{1,0:T(1,128)}', space=vmem, size = 0x9000, scoped, tag = 'internal scratch']
  %s0 = inlined_call_operand.hbm [shape: f32[2,16,32], index: 0, kind: input, shape index: {}]
  %s1 = inlined_call_operand.hbm [shape: f32[32,32], index: 1, kind: input, shape index: {}]
  %s2 = inlined_call_operand.hbm [shape: f32[32,32], index: 2, kind: input, shape index: {}]
  %s3 = inlined_call_operand.hbm [shape: f32[32,32], index: 3, kind: input, shape index: {}]
  %s4 = inlined_call_operand.vmem [shape: f32[1,32], index: 4, kind: input, shape index: {}]
  %s5 = inlined_call_operand.vmem [shape: f32[1,32], index: 5, kind: input, shape index: {}]
  %s6 = inlined_call_operand.vmem [shape: f32[1,32], index: 6, kind: input, shape index: {}]
  %s7 = inlined_call_operand.hbm [shape: f32[2,16,32], index: 7, kind: output, shape index: {0}]
  %s8 = inlined_call_operand.hbm [shape: f32[2,16,32], index: 8, kind: output, shape index: {1}]
  %s9 = inlined_call_operand.hbm [shape: f32[2,16,32], index: 9, kind: output, shape index: {2}]
  %10 = xla_tuple %s7, %s8, %s9
  %s11 = sld [smem:[#allocation0]]
  $region93: #{tpu_custom_call.1} parent=0
    _
  %s13 = ssub.s32 1, %s11
  %s14 = scalar_select 0, %s13, %s11
  $region1: #{tpu_custom_call.1} parent=0
    #allocation2 [shape = 'u8[8192]{0}', space=vmem, size = 0x2000, scoped, tag = 'input window, operand 0']
    #allocation3 [shape = 's32[2]{0}', space=sflag, size = 0x8, scoped, tag = 'scoped memory for tpu_custom_call.1']
    #allocation4 [shape = 's32[2]{0}', space=sflag, size = 0x8, scoped, tag = 'scoped memory for tpu_custom_call.1']
    #allocation5 [shape = 'u8[16384]{0}', space=vmem, size = 0x4000, scoped, tag = 'input window, operand 1, single buffered']
    #allocation6 [shape = 's32[1]{0}', space=sflag, size = 0x4, scoped, tag = 'scoped memory for tpu_custom_call.1']
    #allocation7 [shape = 'u8[16384]{0}', space=vmem, size = 0x4000, scoped, tag = 'input window, operand 2, single buffered']
    #allocation8 [shape = 'u8[16384]{0}', space=vmem, size = 0x4000, scoped, tag = 'input window, operand 3, single buffered']
    #allocation9 [shape = 's32[1]{0}', space=sflag, size = 0x4, scoped, tag = 'scoped memory for tpu_custom_call.1']
    #allocation10 [shape = 'u8[8192]{0}', space=vmem, size = 0x2000, scoped, tag = 'output window, operand 0']
    #allocation11 [shape = 'u8[8192]{0}', space=vmem, size = 0x2000, scoped, tag = 'output window, operand 1']
    #allocation12 [shape = 's32[2]{0}', space=sflag, size = 0x8, scoped, tag = 'scoped memory for tpu_custom_call.1']
    #allocation13 [shape = 'u8[8192]{0}', space=vmem, size = 0x2000, scoped, tag = 'output window, operand 2']
    %15 = vsyncpa [#allocation3], 0
    %s16 = scalar_lea.sflag [#allocation3], 1
    %17 = vsyncpa %s16, 0
    %18 = vsyncpa [#allocation6], 0
    %19 = vsyncpa [#allocation9], 0
    %20 = vsyncpa [#allocation4], 0
    %s21 = scalar_lea.sflag [#allocation4], 1
    %22 = vsyncpa %s21, 0
    %23 = vsyncpa [#allocation12], 0
    %s24 = scalar_lea.sflag [#allocation12], 1
    %25 = vsyncpa %s24, 0
    loop: start=0, step=1, limit=6
    $region2: #{tpu_custom_call.1} parent=1 // loop_pre_header
      _
    $region3: #{tpu_custom_call.1} parent=1 // loop_header
      %s27 = sphi 0, %s31
      %p28 = scmp.ge.s32.totalorder %s27, 6
      %s34 = sphi 0, %s46
      %s35 = sphi 0, %s42
      %s36 = sphi 0, %s34
      %s37 = sphi 0, %s35
      %s38 = sphi 0, %s36
      %s39 = sphi 0, %s37
      %s51 = sphi 0, %s53
      %s54 = sphi 0, %s51
      %s55 = sphi 0, %s54
      %s71 = sphi 0, %s55
      %s75 = sphi 0, %s75
      %s77 = sphi 0, %s75
      %s78 = sphi 0, %s77
      %s92 = sphi 0, %s78
      %s96 = sphi 0, %s96
      %s98 = sphi 0, %s96
      %s99 = sphi 0, %s98
      %s113 = sphi 0, %s99
      %s117 = sphi 0, %s117
      %s119 = sphi 0, %s117
      %s120 = sphi 0, %s119
      %s134 = sphi 0, %s120
      %s138 = sphi 0, %s138
      %s140 = sphi 0, %s138
      %s141 = sphi 0, %s140
      %s155 = sphi 0, %s141
      %s159 = sphi 0, %s159
      %s161 = sphi 0, %s159
      %s162 = sphi 0, %s161
      %s176 = sphi 0, %s162
      %s180 = sphi 0, %s180
      %s182 = sphi 0, %s180
      %s183 = sphi 0, %s182
      %s197 = sphi 0, %s183
      %s205 = sphi 0, %s207
      %s208 = sphi 0, %s205
      %s209 = sphi 0, %s208
      %s225 = sphi 0, %s209
      %s233 = sphi 0, %s235
      %s236 = sphi 0, %s233
      %s237 = sphi 0, %s236
      %s253 = sphi 0, %s237
      %s261 = sphi 0, %s263
      %s264 = sphi 0, %s261
      %s265 = sphi 0, %s264
      %s281 = sphi 0, %s265
    $region4: #{tpu_custom_call.1} parent=1 // loop_header_branch
      %30 = sbr.rel (%p28) target = $region8
    $region5: #{tpu_custom_call.1} parent=1 // loop_body
      %s32 = ssub.s32 %s27, 1
      %s33 = ssub.s32 %s27, 2
      %s40 = sadd.s32 1, %s35
      %p41 = scmp.ge.s32.totalorder %s40, 2
      %s42 = scalar_select %p41, 0, %s40
      %s43 = sadd.s32 1, %s34
      %s44 = scalar_select %p41, %s43, %s34
      %p45 = scmp.ge.s32.totalorder %s44, 2
      %s46 = scalar_select %p45, 0, %s44
      %s47 = ssub.s32 %s34, %s46
      %s48 = ssub.s32 %s35, %s42
      %s49 = sor.u32 %s47, %s48
      %p50 = scmp.eq.s32.totalorder %s49, 0
      %s52 = sadd.s32 %s51, 1
      %s53 = scalar_select %p50, %s51, %s52
      %p56 = pneg %p50
      %p57 = scmp.eq.s32.totalorder %s27, 3
      %p58 = por %p56, %p57
      %p59 = scmp.ne.s32.totalorder %s51, %s54
      %p60 = scmp.eq.s32.totalorder %s27, 0
      %p61 = por %p59, %p60
      %p62 = scmp.ne.s32.totalorder %s51, %s54
      %p63 = scmp.eq.s32.totalorder %s32, 3
      %p64 = por %p62, %p63
      %p65 = scmp.ne.s32.totalorder %s54, %s55
      %p66 = scmp.eq.s32.totalorder %s32, 0
      %p67 = por %p65, %p66
      %p68 = scmp.ne.s32.totalorder %s54, %s55
      %p69 = scmp.eq.s32.totalorder %s33, 3
      %p70 = por %p68, %p69
      %p72 = scmp.ne.s32.totalorder %s55, %s71
      %p73 = scmp.eq.s32.totalorder %s33, 0
      %p74 = por %p72, %p73
      %s76 = sadd.s32 %s75, 1
      %p79 = scmp.eq.s32.totalorder %s27, 3
      %p80 = scmp.ne.s32.totalorder %s75, %s77
      %p81 = scmp.eq.s32.totalorder %s27, 0
      %p82 = por %p80, %p81
      %p83 = scmp.ne.s32.totalorder %s75, %s77
      %p84 = scmp.eq.s32.totalorder %s32, 3
      %p85 = por %p83, %p84
      %p86 = scmp.ne.s32.totalorder %s77, %s78
      %p87 = scmp.eq.s32.totalorder %s32, 0
      %p88 = por %p86, %p87
      %p89 = scmp.ne.s32.totalorder %s77, %s78
      %p90 = scmp.eq.s32.totalorder %s33, 3
      %p91 = por %p89, %p90
      %p93 = scmp.ne.s32.totalorder %s78, %s92
      %p94 = scmp.eq.s32.totalorder %s33, 0
      %p95 = por %p93, %p94
      %s97 = sadd.s32 %s96, 1
      %p100 = scmp.eq.s32.totalorder %s27, 3
      %p101 = scmp.ne.s32.totalorder %s96, %s98
      %p102 = scmp.eq.s32.totalorder %s27, 0
      %p103 = por %p101, %p102
      %p104 = scmp.ne.s32.totalorder %s96, %s98
      %p105 = scmp.eq.s32.totalorder %s32, 3
      %p106 = por %p104, %p105
      %p107 = scmp.ne.s32.totalorder %s98, %s99
      %p108 = scmp.eq.s32.totalorder %s32, 0
      %p109 = por %p107, %p108
      %p110 = scmp.ne.s32.totalorder %s98, %s99
      %p111 = scmp.eq.s32.totalorder %s33, 3
      %p112 = por %p110, %p111
      %p114 = scmp.ne.s32.totalorder %s99, %s113
      %p115 = scmp.eq.s32.totalorder %s33, 0
      %p116 = por %p114, %p115
      %s118 = sadd.s32 %s117, 1
      %p121 = scmp.eq.s32.totalorder %s27, 3
      %p122 = scmp.ne.s32.totalorder %s117, %s119
      %p123 = scmp.eq.s32.totalorder %s27, 0
      %p124 = por %p122, %p123
      %p125 = scmp.ne.s32.totalorder %s117, %s119
      %p126 = scmp.eq.s32.totalorder %s32, 3
      %p127 = por %p125, %p126
      %p128 = scmp.ne.s32.totalorder %s119, %s120
      %p129 = scmp.eq.s32.totalorder %s32, 0
      %p130 = por %p128, %p129
      %p131 = scmp.ne.s32.totalorder %s119, %s120
      %p132 = scmp.eq.s32.totalorder %s33, 3
      %p133 = por %p131, %p132
      %p135 = scmp.ne.s32.totalorder %s120, %s134
      %p136 = scmp.eq.s32.totalorder %s33, 0
      %p137 = por %p135, %p136
      %s139 = sadd.s32 %s138, 1
      %p142 = scmp.eq.s32.totalorder %s27, 3
      %p143 = scmp.ne.s32.totalorder %s138, %s140
      %p144 = scmp.eq.s32.totalorder %s27, 0
      %p145 = por %p143, %p144
      %p146 = scmp.ne.s32.totalorder %s138, %s140
      %p147 = scmp.eq.s32.totalorder %s32, 3
      %p148 = por %p146, %p147
      %p149 = scmp.ne.s32.totalorder %s140, %s141
      %p150 = scmp.eq.s32.totalorder %s32, 0
      %p151 = por %p149, %p150
      %p152 = scmp.ne.s32.totalorder %s140, %s141
      %p153 = scmp.eq.s32.totalorder %s33, 3
      %p154 = por %p152, %p153
      %p156 = scmp.ne.s32.totalorder %s141, %s155
      %p157 = scmp.eq.s32.totalorder %s33, 0
      %p158 = por %p156, %p157
      %s160 = sadd.s32 %s159, 1
      %p163 = scmp.eq.s32.totalorder %s27, 3
      %p164 = scmp.ne.s32.totalorder %s159, %s161
      %p165 = scmp.eq.s32.totalorder %s27, 0
      %p166 = por %p164, %p165
      %p167 = scmp.ne.s32.totalorder %s159, %s161
      %p168 = scmp.eq.s32.totalorder %s32, 3
      %p169 = por %p167, %p168
      %p170 = scmp.ne.s32.totalorder %s161, %s162
      %p171 = scmp.eq.s32.totalorder %s32, 0
      %p172 = por %p170, %p171
      %p173 = scmp.ne.s32.totalorder %s161, %s162
      %p174 = scmp.eq.s32.totalorder %s33, 3
      %p175 = por %p173, %p174
      %p177 = scmp.ne.s32.totalorder %s162, %s176
      %p178 = scmp.eq.s32.totalorder %s33, 0
      %p179 = por %p177, %p178
      %s181 = sadd.s32 %s180, 1
      %p184 = scmp.eq.s32.totalorder %s27, 3
      %p185 = scmp.ne.s32.totalorder %s180, %s182
      %p186 = scmp.eq.s32.totalorder %s27, 0
      %p187 = por %p185, %p186
      %p188 = scmp.ne.s32.totalorder %s180, %s182
      %p189 = scmp.eq.s32.totalorder %s32, 3
      %p190 = por %p188, %p189
      %p191 = scmp.ne.s32.totalorder %s182, %s183
      %p192 = scmp.eq.s32.totalorder %s32, 0
      %p193 = por %p191, %p192
      %p194 = scmp.ne.s32.totalorder %s182, %s183
      %p195 = scmp.eq.s32.totalorder %s33, 3
      %p196 = por %p194, %p195
      %p198 = scmp.ne.s32.totalorder %s183, %s197
      %p199 = scmp.eq.s32.totalorder %s33, 0
      %p200 = por %p198, %p199
      %s201 = ssub.s32 %s34, %s46
      %s202 = ssub.s32 %s35, %s42
      %s203 = sor.u32 %s201, %s202
      %p204 = scmp.eq.s32.totalorder %s203, 0
      %s206 = sadd.s32 %s205, 1
      %s207 = scalar_select %p204, %s205, %s206
      %p210 = pneg %p204
      %p211 = scmp.eq.s32.totalorder %s27, 3
      %p212 = por %p210, %p211
      %p213 = scmp.ne.s32.totalorder %s205, %s208
      %p214 = scmp.eq.s32.totalorder %s27, 0
      %p215 = por %p213, %p214
      %p216 = scmp.ne.s32.totalorder %s205, %s208
      %p217 = scmp.eq.s32.totalorder %s32, 3
      %p218 = por %p216, %p217
      %p219 = scmp.ne.s32.totalorder %s208, %s209
      %p220 = scmp.eq.s32.totalorder %s32, 0
      %p221 = por %p219, %p220
      %p222 = scmp.ne.s32.totalorder %s208, %s209
      %p223 = scmp.eq.s32.totalorder %s33, 3
      %p224 = por %p222, %p223
      %p226 = scmp.ne.s32.totalorder %s209, %s225
      %p227 = scmp.eq.s32.totalorder %s33, 0
      %p228 = por %p226, %p227
      %s229 = ssub.s32 %s34, %s46
      %s230 = ssub.s32 %s35, %s42
      %s231 = sor.u32 %s229, %s230
      %p232 = scmp.eq.s32.totalorder %s231, 0
      %s234 = sadd.s32 %s233, 1
      %s235 = scalar_select %p232, %s233, %s234
      %p238 = pneg %p232
      %p239 = scmp.eq.s32.totalorder %s27, 3
      %p240 = por %p238, %p239
      %p241 = scmp.ne.s32.totalorder %s233, %s236
      %p242 = scmp.eq.s32.totalorder %s27, 0
      %p243 = por %p241, %p242
      %p244 = scmp.ne.s32.totalorder %s233, %s236
      %p245 = scmp.eq.s32.totalorder %s32, 3
      %p246 = por %p244, %p245
      %p247 = scmp.ne.s32.totalorder %s236, %s237
      %p248 = scmp.eq.s32.totalorder %s32, 0
      %p249 = por %p247, %p248
      %p250 = scmp.ne.s32.totalorder %s236, %s237
      %p251 = scmp.eq.s32.totalorder %s33, 3
      %p252 = por %p250, %p251
      %p254 = scmp.ne.s32.totalorder %s237, %s253
      %p255 = scmp.eq.s32.totalorder %s33, 0
      %p256 = por %p254, %p255
      %s257 = ssub.s32 %s34, %s46
      %s258 = ssub.s32 %s35, %s42
      %s259 = sor.u32 %s257, %s258
      %p260 = scmp.eq.s32.totalorder %s259, 0
      %s262 = sadd.s32 %s261, 1
      %s263 = scalar_select %p260, %s261, %s262
      %p266 = pneg %p260
      %p267 = scmp.eq.s32.totalorder %s27, 3
      %p268 = por %p266, %p267
      %p269 = scmp.ne.s32.totalorder %s261, %s264
      %p270 = scmp.eq.s32.totalorder %s27, 0
      %p271 = por %p269, %p270
      %p272 = scmp.ne.s32.totalorder %s261, %s264
      %p273 = scmp.eq.s32.totalorder %s32, 3
      %p274 = por %p272, %p273
      %p275 = scmp.ne.s32.totalorder %s264, %s265
      %p276 = scmp.eq.s32.totalorder %s32, 0
      %p277 = por %p275, %p276
      %p278 = scmp.ne.s32.totalorder %s264, %s265
      %p279 = scmp.eq.s32.totalorder %s33, 3
      %p280 = por %p278, %p279
      %p282 = scmp.ne.s32.totalorder %s265, %s281
      %p283 = scmp.eq.s32.totalorder %s33, 0
      %p284 = por %p282, %p283
      %p285 = scmp.le.s32.totalorder 1, %s27
      %p286 = scmp.lt.s32.totalorder %s27, 5
      %p287 = pnand %p285, %p286
      %p288 = pneg %p287
      // Predicated region
      $region9: #{tpu_custom_call.1} parent=5 // pred_check
        _
      $region10: #{tpu_custom_call.1} parent=5 // pred_check_branch
        %290 = sbr.rel (%p287) target = $region12
      $region11: #{tpu_custom_call.1} parent=5 // pred_region
        %s291 = ssub.s32 %s27, 1
        // Predicated region
        $region13: #{tpu_custom_call.1} parent=11 // pred_check
          %p292 = pneg %p88
        $region14: #{tpu_custom_call.1} parent=11 // pred_check_branch
          %294 = sbr.rel (%p292) target = $region16
        $region15: #{tpu_custom_call.1} parent=11 // pred_region
          %296 = vsyncadd [#allocation6], 0
          %s297 = sshll.u32 %s1, 4
          %s298 = int_to_ptr.hbm [resolvable:$true] %s297
          %s299 = sshll.u32 [#allocation5], 4
          %s300 = int_to_ptr.vmem [resolvable:$true] %s299
          %305 = dma.hbm_to_vmem [thread:$0]  %s298, 512, %s300, [#allocation6], 128, 128, 8
        $region16: #{tpu_custom_call.1} parent=11 // pred_fallthru
          _
        // Predicated region
        $region17: #{tpu_custom_call.1} parent=11 // pred_check
          %p306 = pneg %p109
        $region18: #{tpu_custom_call.1} parent=11 // pred_check_branch
          %308 = sbr.rel (%p306) target = $region20
        $region19: #{tpu_custom_call.1} parent=11 // pred_region
          %310 = vsyncadd [#allocation6], 0
          %s311 = sshll.u32 %s2, 4
          %s312 = int_to_ptr.hbm [resolvable:$true] %s311
          %s313 = sshll.u32 [#allocation7], 4
          %s314 = int_to_ptr.vmem [resolvable:$true] %s313
          %319 = dma.hbm_to_vmem [thread:$0]  %s312, 512, %s314, [#allocation6], 128, 128, 8
        $region20: #{tpu_custom_call.1} parent=11 // pred_fallthru
          _
        // Predicated region
        $region21: #{tpu_custom_call.1} parent=11 // pred_check
          %p320 = pneg %p130
        $region22: #{tpu_custom_call.1} parent=11 // pred_check_branch
          %322 = sbr.rel (%p320) target = $region24
        $region23: #{tpu_custom_call.1} parent=11 // pred_region
          %324 = vsyncadd [#allocation9], 0
          %s325 = sshll.u32 %s3, 4
          %s326 = int_to_ptr.hbm [resolvable:$true] %s325
          %s327 = sshll.u32 [#allocation8], 4
          %s328 = int_to_ptr.vmem [resolvable:$true] %s327
          %333 = dma.hbm_to_vmem [thread:$0]  %s326, 512, %s328, [#allocation9], 128, 128, 8
        $region24: #{tpu_custom_call.1} parent=11 // pred_fallthru
          _
        // Predicated region
        $region25: #{tpu_custom_call.1} parent=11 // pred_check
          %p334 = pneg %p151
        $region26: #{tpu_custom_call.1} parent=11 // pred_check_branch
          %336 = sbr.rel (%p334) target = $region28
        $region27: #{tpu_custom_call.1} parent=11 // pred_region
          _
        $region28: #{tpu_custom_call.1} parent=11 // pred_fallthru
          _
        // Predicated region
        $region29: #{tpu_custom_call.1} parent=11 // pred_check
          %p337 = pneg %p172
        $region30: #{tpu_custom_call.1} parent=11 // pred_check_branch
          %339 = sbr.rel (%p337) target = $region32
        $region31: #{tpu_custom_call.1} parent=11 // pred_region
          _
        $region32: #{tpu_custom_call.1} parent=11 // pred_fallthru
          _
        // Predicated region
        $region33: #{tpu_custom_call.1} parent=11 // pred_check
          %p340 = pneg %p193
        $region34: #{tpu_custom_call.1} parent=11 // pred_check_branch
          %342 = sbr.rel (%p340) target = $region36
        $region35: #{tpu_custom_call.1} parent=11 // pred_region
          _
        $region36: #{tpu_custom_call.1} parent=11 // pred_fallthru
          _
      $region12: #{tpu_custom_call.1} parent=5 // pred_fallthru
        _
      %p343 = scmp.lt.s32.totalorder %s27, 4
      // Predicated region
      $region37: #{tpu_custom_call.1} parent=5 // pred_check
        %p344 = pneg %p343
      $region38: #{tpu_custom_call.1} parent=5 // pred_check_branch
        %346 = sbr.rel (%p344) target = $region40
      $region39: #{tpu_custom_call.1} parent=5 // pred_region
        // Predicated region
        $region41: #{tpu_custom_call.1} parent=39 // pred_check
          %p347 = pneg %p61
        $region42: #{tpu_custom_call.1} parent=39 // pred_check_branch
          %349 = sbr.rel (%p347) target = $region44
        $region43: #{tpu_custom_call.1} parent=39 // pred_region
          %s350 = sand.u32 %s51, 1
          %s351 = scalar_lea.sflag [#allocation3], %s350
          %s352 = sand.u32 %s51, 1
          %s353 = smul.addr %s352, 8
          %s354 = scalar_lea.vmem [#allocation2], %s353
          %356 = vsyncadd %s351, 0
          %s357 = smul.addr %s34, 2
          %s358 = sadd.s32 %s35, %s357
          %s359 = smul.addr %s358, 8
          %s360 = scalar_lea.hbm %s0, %s359
          %s362 = sshll.u32 %s360, 4
          %s363 = int_to_ptr.hbm [resolvable:$true] %s362
          %s364 = sshll.u32 %s354, 4
          %s365 = int_to_ptr.vmem [resolvable:$true] %s364
          %367 = dma.hbm_to_vmem [thread:$0]  %s363, 128, %s365, %s351
        $region44: #{tpu_custom_call.1} parent=39 // pred_fallthru
          _
      $region40: #{tpu_custom_call.1} parent=5 // pred_fallthru
        _
      %p368 = scmp.le.s32.totalorder 1, %s27
      %p369 = scmp.lt.s32.totalorder %s27, 5
      %p370 = pnand %p368, %p369
      %p371 = pneg %p370
      // Predicated region
      $region45: #{tpu_custom_call.1} parent=5 // pred_check
        _
      $region46: #{tpu_custom_call.1} parent=5 // pred_check_branch
        %373 = sbr.rel (%p370) target = $region48
      $region47: #{tpu_custom_call.1} parent=5 // pred_region
        %s374 = ssub.s32 %s27, 1
        %s375 = sand.u32 %s54, 1
        %s376 = scalar_lea.sflag [#allocation3], %s375
        %s377 = sand.u32 %s54, 1
        %s378 = smul.addr %s377, 8
        %s379 = scalar_lea.vmem [#allocation2], %s378
        // Predicated region
        $region49: #{tpu_custom_call.1} parent=47 // pred_check
          %p380 = pneg %p67
        $region50: #{tpu_custom_call.1} parent=47 // pred_check_branch
          %382 = sbr.rel (%p380) target = $region52
        $region51: #{tpu_custom_call.1} parent=47 // pred_region
          %384 = dma.done %s376, 128
        $region52: #{tpu_custom_call.1} parent=47 // pred_fallthru
          _
        // Predicated region
        $region53: #{tpu_custom_call.1} parent=47 // pred_check
          %p385 = pneg %p88
        $region54: #{tpu_custom_call.1} parent=47 // pred_check_branch
          %387 = sbr.rel (%p385) target = $region56
        $region55: #{tpu_custom_call.1} parent=47 // pred_region
          %389 = dma.done [#allocation6], 512
        $region56: #{tpu_custom_call.1} parent=47 // pred_fallthru
          _
        // Predicated region
        $region57: #{tpu_custom_call.1} parent=47 // pred_check
          %p390 = pneg %p109
        $region58: #{tpu_custom_call.1} parent=47 // pred_check_branch
          %392 = sbr.rel (%p390) target = $region60
        $region59: #{tpu_custom_call.1} parent=47 // pred_region
          %394 = dma.done [#allocation6], 512
        $region60: #{tpu_custom_call.1} parent=47 // pred_fallthru
          _
        // Predicated region
        $region61: #{tpu_custom_call.1} parent=47 // pred_check
          %p395 = pneg %p130
        $region62: #{tpu_custom_call.1} parent=47 // pred_check_branch
          %397 = sbr.rel (%p395) target = $region64
        $region63: #{tpu_custom_call.1} parent=47 // pred_region
          %399 = dma.done [#allocation9], 512
        $region64: #{tpu_custom_call.1} parent=47 // pred_fallthru
          _
        %s400 = sand.u32 %s54, 1
        %s401 = scalar_lea.sflag [#allocation3], %s400
        %s402 = sand.u32 %s54, 1
        %s403 = smul.addr %s402, 8
        %s404 = scalar_lea.vmem [#allocation2], %s403
        %p405 = pneg %p67
        %p406 = pneg %p64
        %p407 = pneg %p88
        %p408 = pneg %p85
        %p409 = pneg %p109
        %p410 = pneg %p106
        %p411 = pneg %p130
        %p412 = pneg %p127
        %p413 = pneg %p151
        %p414 = pneg %p148
        %p415 = pneg %p172
        %p416 = pneg %p169
        %p417 = pneg %p193
        %p418 = pneg %p190
        %p419 = pneg %p221
        %p420 = pneg %p218
        %s421 = sand.u32 %s208, 1
        %s422 = scalar_lea.sflag [#allocation4], %s421
        %s423 = sand.u32 %s208, 1
        %s424 = smul.addr %s423, 8
        %s425 = scalar_lea.vmem [#allocation10], %s424
        %p426 = pneg %p249
        %p427 = pneg %p246
        %s428 = sand.u32 %s32, 1
        %s429 = scalar_lea.sflag [#allocation12], %s428
        %s430 = sand.u32 %s236, 1
        %s431 = smul.addr %s430, 8
        %s432 = scalar_lea.vmem [#allocation11], %s431
        %p433 = pneg %p277
        %p434 = pneg %p274
        %s435 = sand.u32 %s32, 1
        %s436 = scalar_lea.sflag [#allocation12], %s435
        %s437 = sand.u32 %s264, 1
        %s438 = smul.addr %s437, 8
        %s439 = scalar_lea.vmem [#allocation13], %s438
        %v440 = vld [vmem:[%s379] sm:$0xff]
        %v441 = vld [vmem:[#allocation5] sm:$0xff]
        %v442 = vld [vmem:[#allocation5 + $0x8] sm:$0xff]
        %v443 = vld [vmem:[#allocation5 + $0x10] sm:$0xff]
        %v444 = vld [vmem:[#allocation5 + $0x18] sm:$0xff]
        %v445 = vld [vmem:[%s4] sm:$0x1]
        %v447 = vperm.slane %v445, 0
        %vm449 = vcmask 261120
        %v451 = vsel %vm449, %v440, 0
        %453 = vmatpush.msra.mxu0 0.0
        %454 = vmatpush.msra.mxu0 0.0
        %455 = vmatpush.msra.mxu0 0.0
        %456 = vmatpush.msra.mxu0 0.0
        %457 = vmatpush.msra.mxu0 0.0
        %458 = vmatpush.msra.mxu0 0.0
        %459 = vmatpush.msra.mxu0 0.0
        %460 = vmatpush.msra.mxu0 0.0
        %461 = vmatpush.msra.mxu0 0.0
        %462 = vmatpush.msra.mxu0 0.0
        %463 = vmatpush.msra.mxu0 0.0
        %464 = vmatpush.msra.mxu0 0.0
        %465 = vmatpush.msra.mxu0 %v444
        %466 = vmatpush.msra.mxu0 %v443
        %467 = vmatpush.msra.mxu0 %v442
        %468 = vmatpush.msra.mxu0 %v441
        %469 = vmatmul.f32.gmra.mxu0 %v451
        %v470 = vpop.f32.mrf.mxu0
        %v471 = vadd.f32 %v447, %v470
        %472 = vdwg.mxu0
        %473 = vst.msk [vmem:[%s425] sm:$0xff] %vm449, %v471
        %v474 = vld [vmem:[#allocation7] sm:$0xff]
        %v475 = vld [vmem:[#allocation7 + $0x8] sm:$0xff]
        %v476 = vld [vmem:[#allocation7 + $0x10] sm:$0xff]
        %v477 = vld [vmem:[#allocation7 + $0x18] sm:$0xff]
        %v478 = vld [vmem:[%s5] sm:$0x1]
        %v480 = vperm.slane %v478, 0
        %482 = vmatpush.msra.mxu0 0.0
        %483 = vmatpush.msra.mxu0 0.0
        %484 = vmatpush.msra.mxu0 0.0
        %485 = vmatpush.msra.mxu0 0.0
        %486 = vmatpush.msra.mxu0 0.0
        %487 = vmatpush.msra.mxu0 0.0
        %488 = vmatpush.msra.mxu0 0.0
        %489 = vmatpush.msra.mxu0 0.0
        %490 = vmatpush.msra.mxu0 0.0
        %491 = vmatpush.msra.mxu0 0.0
        %492 = vmatpush.msra.mxu0 0.0
        %493 = vmatpush.msra.mxu0 0.0
        %494 = vmatpush.msra.mxu0 %v477
        %495 = vmatpush.msra.mxu0 %v476
        %496 = vmatpush.msra.mxu0 %v475
        %497 = vmatpush.msra.mxu0 %v474
        %498 = vmatmul.f32.gmra.mxu0 %v451
        %v499 = vpop.f32.mrf.mxu0
        %v500 = vadd.f32 %v480, %v499
        %501 = vdwg.mxu0
        %502 = vst.msk [vmem:[%s432] sm:$0xff] %vm449, %v500
        %v503 = vld [vmem:[#allocation8] sm:$0xff]
        %v504 = vld [vmem:[#allocation8 + $0x8] sm:$0xff]
        %v505 = vld [vmem:[#allocation8 + $0x10] sm:$0xff]
        %v506 = vld [vmem:[#allocation8 + $0x18] sm:$0xff]
        %v507 = vld [vmem:[%s6] sm:$0x1]
        %v509 = vperm.slane %v507, 0
        %511 = vmatpush.msra.mxu0 0.0
        %512 = vmatpush.msra.mxu0 0.0
        %513 = vmatpush.msra.mxu0 0.0
        %514 = vmatpush.msra.mxu0 0.0
        %515 = vmatpush.msra.mxu0 0.0
        %516 = vmatpush.msra.mxu0 0.0
        %517 = vmatpush.msra.mxu0 0.0
        %518 = vmatpush.msra.mxu0 0.0
        %519 = vmatpush.msra.mxu0 0.0
        %520 = vmatpush.msra.mxu0 0.0
        %521 = vmatpush.msra.mxu0 0.0
        %522 = vmatpush.msra.mxu0 0.0
        %523 = vmatpush.msra.mxu0 %v506
        %524 = vmatpush.msra.mxu0 %v505
        %525 = vmatpush.msra.mxu0 %v504
        %526 = vmatpush.msra.mxu0 %v503
        %527 = vmatmul.f32.gmra.mxu0 %v451
        %v528 = vpop.f32.mrf.mxu0
        %v529 = vadd.f32 %v509, %v528
        %530 = vdwg.mxu0
        %531 = vst.msk [vmem:[%s439] sm:$0xff] %vm449, %v529
        %s532 = sand.u32 %s208, 1
        %s533 = scalar_lea.sflag [#allocation4], %s532
        %s534 = sand.u32 %s208, 1
        %s535 = smul.addr %s534, 8
        %s536 = scalar_lea.vmem [#allocation10], %s535
        %s537 = sand.u32 %s32, 1
        %s538 = scalar_lea.sflag [#allocation12], %s537
        %s539 = sand.u32 %s236, 1
        %s540 = smul.addr %s539, 8
        %s541 = scalar_lea.vmem [#allocation11], %s540
        %s542 = sand.u32 %s32, 1
        %s543 = scalar_lea.sflag [#allocation12], %s542
        %s544 = sand.u32 %s264, 1
        %s545 = smul.addr %s544, 8
        %s546 = scalar_lea.vmem [#allocation13], %s545
        // Predicated region
        $region65: #{tpu_custom_call.1} parent=47 // pred_check
          %p547 = pneg %p218
        $region66: #{tpu_custom_call.1} parent=47 // pred_check_branch
          %549 = sbr.rel (%p547) target = $region68
        $region67: #{tpu_custom_call.1} parent=47 // pred_region
          %551 = vsyncadd %s533, 0
          %s552 = smul.addr %s36, 2
          %s553 = sadd.s32 %s37, %s552
          %s554 = smul.addr %s553, 8
          %s555 = scalar_lea.hbm %s7, %s554
          %s557 = sshll.u32 %s536, 4
          %s558 = int_to_ptr.vmem [resolvable:$true] %s557
          %s559 = sshll.u32 %s555, 4
          %s560 = int_to_ptr.hbm [resolvable:$true] %s559
          %562 = dma.vmem_to_hbm [thread:$0]  %s558, 128, %s560, %s533
        $region68: #{tpu_custom_call.1} parent=47 // pred_fallthru
          _
        // Predicated region
        $region69: #{tpu_custom_call.1} parent=47 // pred_check
          %p563 = pneg %p246
        $region70: #{tpu_custom_call.1} parent=47 // pred_check_branch
          %565 = sbr.rel (%p563) target = $region72
        $region71: #{tpu_custom_call.1} parent=47 // pred_region
          %567 = vsyncadd %s538, 0
          %s568 = smul.addr %s36, 2
          %s569 = sadd.s32 %s37, %s568
          %s570 = smul.addr %s569, 8
          %s571 = scalar_lea.hbm %s8, %s570
          %s573 = sshll.u32 %s541, 4
          %s574 = int_to_ptr.vmem [resolvable:$true] %s573
          %s575 = sshll.u32 %s571, 4
          %s576 = int_to_ptr.hbm [resolvable:$true] %s575
          %578 = dma.vmem_to_hbm [thread:$0]  %s574, 128, %s576, %s538
        $region72: #{tpu_custom_call.1} parent=47 // pred_fallthru
          _
        // Predicated region
        $region73: #{tpu_custom_call.1} parent=47 // pred_check
          %p579 = pneg %p274
        $region74: #{tpu_custom_call.1} parent=47 // pred_check_branch
          %581 = sbr.rel (%p579) target = $region76
        $region75: #{tpu_custom_call.1} parent=47 // pred_region
          %583 = vsyncadd %s543, 0
          %s584 = smul.addr %s36, 2
          %s585 = sadd.s32 %s37, %s584
          %s586 = smul.addr %s585, 8
          %s587 = scalar_lea.hbm %s9, %s586
          %s589 = sshll.u32 %s546, 4
          %s590 = int_to_ptr.vmem [resolvable:$true] %s589
          %s591 = sshll.u32 %s587, 4
          %s592 = int_to_ptr.hbm [resolvable:$true] %s591
          %594 = dma.vmem_to_hbm [thread:$0]  %s590, 128, %s592, %s543
        $region76: #{tpu_custom_call.1} parent=47 // pred_fallthru
          _
      $region48: #{tpu_custom_call.1} parent=5 // pred_fallthru
        _
      %p595 = scmp.le.s32.totalorder 2, %s27
      // Predicated region
      $region77: #{tpu_custom_call.1} parent=5 // pred_check
        %p596 = pneg %p595
      $region78: #{tpu_custom_call.1} parent=5 // pred_check_branch
        %598 = sbr.rel (%p596) target = $region80
      $region79: #{tpu_custom_call.1} parent=5 // pred_region
        %s599 = ssub.s32 %s27, 2
        // Predicated region
        $region81: #{tpu_custom_call.1} parent=79 // pred_check
          %p600 = pneg %p224
        $region82: #{tpu_custom_call.1} parent=79 // pred_check_branch
          %602 = sbr.rel (%p600) target = $region84
        $region83: #{tpu_custom_call.1} parent=79 // pred_region
          %s603 = sand.u32 %s209, 1
          %s604 = scalar_lea.sflag [#allocation4], %s603
          %s605 = sand.u32 %s209, 1
          %s606 = smul.addr %s605, 8
          %s607 = scalar_lea.vmem [#allocation10], %s606
          %609 = dma.done %s604, 128
        $region84: #{tpu_custom_call.1} parent=79 // pred_fallthru
          _
        // Predicated region
        $region85: #{tpu_custom_call.1} parent=79 // pred_check
          %p610 = pneg %p252
        $region86: #{tpu_custom_call.1} parent=79 // pred_check_branch
          %612 = sbr.rel (%p610) target = $region88
        $region87: #{tpu_custom_call.1} parent=79 // pred_region
          %s613 = sand.u32 %s33, 1
          %s614 = scalar_lea.sflag [#allocation12], %s613
          %s615 = sand.u32 %s237, 1
          %s616 = smul.addr %s615, 8
          %s617 = scalar_lea.vmem [#allocation11], %s616
          %619 = dma.done %s614, 128
        $region88: #{tpu_custom_call.1} parent=79 // pred_fallthru
          _
        // Predicated region
        $region89: #{tpu_custom_call.1} parent=79 // pred_check
          %p620 = pneg %p280
        $region90: #{tpu_custom_call.1} parent=79 // pred_check_branch
          %622 = sbr.rel (%p620) target = $region92
        $region91: #{tpu_custom_call.1} parent=79 // pred_region
          %s623 = sand.u32 %s33, 1
          %s624 = scalar_lea.sflag [#allocation12], %s623
          %s625 = sand.u32 %s265, 1
          %s626 = smul.addr %s625, 8
          %s627 = scalar_lea.vmem [#allocation13], %s626
          %629 = dma.done %s624, 128
        $region92: #{tpu_custom_call.1} parent=79 // pred_fallthru
          _
      $region80: #{tpu_custom_call.1} parent=5 // pred_fallthru
        _
    $region6: #{tpu_custom_call.1} parent=1 // loop_footer
      %s31 = sadd.s32 1, %s27
    $region7: #{tpu_custom_call.1} parent=1 // loop_footer_branch
      %26 = sbr.rel target = $region3
    $region8: #{tpu_custom_call.1} parent=1 // loop_exit
      _
    %630 = vsyncpa [#allocation3], 1
    %s631 = scalar_lea.sflag [#allocation3], 1
    %632 = vsyncpa %s631, 1
    %633 = vsyncpa [#allocation6], 1
    %634 = vsyncpa [#allocation9], 1
    %635 = vsyncpa [#allocation4], 1
    %s636 = scalar_lea.sflag [#allocation4], 1
    %637 = vsyncpa %s636, 1
    %638 = vsyncpa [#allocation12], 1
    %s639 = scalar_lea.sflag [#allocation12], 1
    %640 = vsyncpa %s639, 1

</llo_original>
